<compile_context>
chip_gen: v6e
topology: v6e:2x2x1
jax: 0.10.0
libtpu: 0.0.40
codegen_flags: <defaults>
</compile_context>

<pallas_src>
import math
from typing import NamedTuple

import jax
import jax.numpy as jnp
from jax.experimental import pallas as pl
from jax.experimental.pallas import tpu as pltpu


# ---------------------------------------------------------------------------
# Kernel
# ---------------------------------------------------------------------------
def _not_kernel(x_ref, w1_ref, b1_ref, w2m_ref, b2m_ref, wqkv_ref, o_ref):
    """Fused 4-layer NOT forward for one batch block.

    x_ref    : (bt, S, Dp)  sequence block
    w1_ref   : (3, Dp, Dp)  first-matmul weights of the 3 MLP layers (compute dtype)
    b1_ref   : (3, 1,  Dp)  first biases (f32)
    w2m_ref  : (3, Dp, Dp)  second-matmul weights with output mask folded in
    b2m_ref  : (3, 1,  Dp)  second biases with output mask folded in (f32)
    wqkv_ref : (Dp, 3*Dp)   fused [Wq/sqrt(D) | Wk | Wv*mask] projection
    o_ref    : (bt, S, Dp)  output block
    """
    bt, S, Dp = x_ref.shape
    cdt = w1_ref.dtype  # MXU operand dtype (bf16 in production; f32 also works)

    # Flatten (bt, S, Dp) -> (bt*S, Dp): taller M for the MXU, lane-dense minor
    # dim.  This relayout is free as long as S is a multiple of 8 (f32 sublane).
    x = x_ref[...].astype(jnp.float32).reshape(bt * S, Dp)

    def mlp(x, i):
        # MLPLayer: x + (relu(x @ W1 + b1) @ W2 + b2) * mask, with the mask
        # pre-folded into W2 / b2 on the host.  MXU operands in `cdt`, f32
        # accumulation; relu / bias adds / residual stay in f32 on the VPU.
        a = jnp.maximum(
            jnp.dot(x.astype(cdt), w1_ref[i],
                    preferred_element_type=jnp.float32) + b1_ref[i],
            0.0)
        y = jnp.dot(a.astype(cdt), w2m_ref[i],
                    preferred_element_type=jnp.float32)
        return x + y + b2m_ref[i]

    x = mlp(x, 0)                                   # NOT_To
    x = mlp(x, 1)                                   # Clear(register)

    # Copy (AttentionLayer / GRLT2): one fused QKV projection.  1/sqrt(D) is
    # folded into the Q columns, the attention output mask into the V columns.
    qkv = jnp.dot(x.astype(cdt), wqkv_ref[...],
                  preferred_element_type=jnp.float32)          # (bt*S, 3*Dp)
    qkv = qkv.reshape(bt, S, 3 * Dp)
    q = qkv[:, :, :Dp]
    k = qkv[:, :, Dp:2 * Dp]
    v = qkv[:, :, 2 * Dp:]

    # scores = q @ k^T: transposed-contraction einsum, no explicit transpose.
    # The reference's "causal mask" is triu(...) * 0 == all zeros -> omitted.
    # TODO(synk): for production sequence lengths, tile keys in 128-wide
    # chunks with an online softmax so the scores' last dim stays lane-dense.
    s = jnp.einsum("bqd,bkd->bqk", q.astype(cdt), k.astype(cdt),
                   preferred_element_type=jnp.float32)
    m = jnp.max(s, axis=-1, keepdims=True)
    e = jnp.exp(s - m)                               # f32 on the EUP
    p = e * pl.reciprocal(jnp.sum(e, axis=-1, keepdims=True), approx=True)
    attn = jnp.einsum("bqk,bkd->bqd", p.astype(cdt), v.astype(cdt),
                      preferred_element_type=jnp.float32)

    x = (x.reshape(bt, S, Dp) + attn).reshape(bt * S, Dp)

    x = mlp(x, 2)                                   # Clear(work registers)

    o_ref[...] = x.reshape(bt, S, Dp).astype(o_ref.dtype)


# ---------------------------------------------------------------------------
# One-time host-side parameter prep (hoisted out of the per-call path)
# ---------------------------------------------------------------------------
class NotParams(NamedTuple):
    w1s: jax.Array    # (3, Dp, Dp)  compute dtype
    b1s: jax.Array    # (3, 1,  Dp)  f32
    w2m: jax.Array    # (3, Dp, Dp)  compute dtype, mask folded
    b2m: jax.Array    # (3, 1,  Dp)  f32, mask folded
    wqkv: jax.Array   # (Dp, 3*Dp)   compute dtype, 1/sqrt(D) and mask folded
    d_model: int
    d_pad: int


def prepare_not_params(mlp_params, attn_params, *, compute_dtype=jnp.bfloat16):
    """Pad, fold, stack and cast the NOT weights ONCE; reuse for every call.

    mlp_params:  [(W1, b1, W2, b2, mask)] * 3   for NOT_To, Clear(reg), Clear(work)
    attn_params: (Wq, Wk, Wv, mask)             for Copy (GRLT2, steps=0)
    """
    D = mlp_params[0][0].shape[0]
    Dp = max(128, ((D + 127) // 128) * 128)      # lane-dense padded feature dim

    def pad_w(w):
        return jnp.pad(w, ((0, Dp - w.shape[0]), (0, Dp - w.shape[1])))

    def pad_b(b):
        return jnp.pad(b, (0, Dp - b.shape[0]))[None, :]

    # The per-output-column mask is diagonal on the output side, so it commutes
    # exactly through the second matmul: fold it into W2 / b2 (and into Wv).
    w1s = jnp.stack([pad_w(w1) for (w1, _, _, _, _) in mlp_params])
    b1s = jnp.stack([pad_b(b1) for (_, b1, _, _, _) in mlp_params])
    w2m = jnp.stack([pad_w(w2 * m[None, :]) for (_, _, w2, _, m) in mlp_params])
    b2m = jnp.stack([pad_b(b2 * m) for (_, _, _, b2, m) in mlp_params])

    wq, wk, wv, amask = attn_params
    wqkv = jnp.concatenate(
        [pad_w(wq * (1.0 / math.sqrt(D))),       # fold 1/sqrt(dim) into Q
         pad_w(wk),
         pad_w(wv * amask[None, :])],            # fold attn output mask into V
        axis=1)                                  # (Dp, 3*Dp): one MXU projection

    return NotParams(
        w1s=w1s.astype(compute_dtype),
        b1s=b1s.astype(jnp.float32),
        w2m=w2m.astype(compute_dtype),
        b2m=b2m.astype(jnp.float32),
        wqkv=wqkv.astype(compute_dtype),
        d_model=D,
        d_pad=Dp,
    )


# ---------------------------------------------------------------------------
# Forward wrappers
# ---------------------------------------------------------------------------
def not_forward_padded(seq_p, params, *, batch_block=None, out_dtype=None,
                       vmem_limit_bytes=None):
    """Fused NOT forward on an already Dp-padded (B, S, Dp) sequence.

    Call this directly (and keep activations Dp-padded end-to-end) in a larger
    pipeline to avoid the pad + slice HBM round-trip entirely.

    batch_block:
      * None (default): one grid step over the whole batch -- best on the
        single-TensorCore v5e/v6e, where extra grid steps are pure overhead.
      * v7x: pass batch_block <= B//2 (ideally 4-8 grid steps, with
        batch_block*S a multiple of 256) so the "parallel" batch axis shards
        across the two TensorCores and seq/out DMAs pipeline.
    vmem_limit_bytes: raise the scoped-VMEM cap (v5e default 16 MiB,
      v6e/v7x 32 MiB) when growing batch_block at production sizes; on v7x
      budget against 64 MiB physical (the f32 (bt*S, 3*Dp) qkv temp is the
      largest live buffer).
    out_dtype: pass jnp.bfloat16 to halve the output writeback if downstream
      tolerates it.
    """
    B, S, Dp = seq_p.shape
    assert Dp == params.d_pad
    bt = B if batch_block is None else batch_block
    assert B % bt == 0
    grid = (B // bt,)
    out_dtype = seq_p.dtype if out_dtype is None else out_dtype

    cp_kwargs = dict(dimension_semantics=("parallel",))
    if vmem_limit_bytes is not None:
        cp_kwargs["vmem_limit_bytes"] = vmem_limit_bytes

    return pl.pallas_call(
        _not_kernel,
        out_shape=jax.ShapeDtypeStruct((B, S, Dp), out_dtype),
        grid_spec=pltpu.PrefetchScalarGridSpec(
            num_scalar_prefetch=0,
            grid=grid,
            in_specs=[
                # Sequence block.  If profiling at production sizes shows this
                # DMA exposed (grid > 1), add pipeline_mode=pl.Buffered(3).
                pl.BlockSpec((bt, S, Dp), lambda b: (b, 0, 0)),
                # Constant-indexed weight stacks: fetched once, stay resident.
                pl.BlockSpec((3, Dp, Dp), lambda b: (0, 0, 0)),   # W1 stack
                pl.BlockSpec((3, 1, Dp), lambda b: (0, 0, 0)),    # b1 stack
                pl.BlockSpec((3, Dp, Dp), lambda b: (0, 0, 0)),   # (W2*mask) stack
                pl.BlockSpec((3, 1, Dp), lambda b: (0, 0, 0)),    # (b2*mask) stack
                pl.BlockSpec((Dp, 3 * Dp), lambda b: (0, 0)),     # fused Wq|Wk|Wv*mask
            ],
            out_specs=pl.BlockSpec((bt, S, Dp), lambda b: (b, 0, 0)),
        ),
        compiler_params=pltpu.CompilerParams(**cp_kwargs),
    )(seq_p, params.w1s, params.b1s, params.w2m, params.b2m, params.wqkv)


def not_forward(seq, params, **kwargs):
    """Convenience wrapper: pad the feature dim, run the kernel, slice back."""
    B, S, D = seq.shape
    assert D == params.d_model
    Dp = params.d_pad
    seq_p = seq if Dp == D else jnp.pad(seq, ((0, 0), (0, 0), (0, Dp - D)))
    out = not_forward_padded(seq_p, params, **kwargs)
    return out if Dp == D else out[..., :D]


# ---------------------------------------------------------------------------
# Pure-JAX reference (mirrors the PyTorch module exactly, in f32)
# ---------------------------------------------------------------------------
def _reference(seq, mlp_params, attn_params):
    """NOT.forward: NOT_To -> Clear(reg) -> Copy -> Clear(work)."""
    def mlp(x, w1, b1, w2, b2, mask):
        a = jax.nn.relu(x @ w1 + b1)
        return x + (a @ w2 + b2) * mask

    def attention(x, wq, wk, wv, mask):
        d = x.shape[-1]
        q = x @ wq
        k = x @ wk
        v = x @ wv
        # causal_mask = triu(ones, diagonal=1) * 0 == zeros in the PyTorch module.
        scores = q @ jnp.swapaxes(k, -1, -2) / math.sqrt(d)
        p = jax.nn.softmax(scores, axis=-1)
        return x + (p @ v) * mask

    x = mlp(seq, *mlp_params[0])     # NOT_To
    x = mlp(x, *mlp_params[1])       # Clear(register)
    x = attention(x, *attn_params)   # Copy (GRLT2, steps=0)
    x = mlp(x, *mlp_params[2])       # Clear(work registers)
    return x


if __name__ == "__main__":
    B, S, D = 2, 8, 32
    key = jax.random.PRNGKey(0)
    k_seq, k_mlp, k_attn = jax.random.split(key, 3)

    seq = jax.random.normal(k_seq, (B, S, D), dtype=jnp.float32)

    def xavier(k, shape):
        bound = math.sqrt(6.0 / (shape[0] + shape[1]))
        return jax.random.uniform(k, shape, jnp.float32, -bound, bound)

    # Three MLP "instructions" (NOT_To, Clear(register), Clear(work registers)):
    # xavier weights, small biases, 0/1 register-style output masks.
    mlp_params = []
    for lk in jax.random.split(k_mlp, 3):
        kw1, kb1, kw2, kb2, km = jax.random.split(lk, 5)
        mlp_params.append((
            xavier(kw1, (D, D)),
            0.1 * jax.random.normal(kb1, (D,), dtype=jnp.float32),
            xavier(kw2, (D, D)),
            0.1 * jax.random.normal(kb2, (D,), dtype=jnp.float32),
            (jax.random.uniform(km, (D,)) > 0.5).astype(jnp.float32),
        ))

    # Attention "instruction" (Copy / GRLT2): xavier Q/K/V and a 0/1 output mask.
    kq, kk, kv, km = jax.random.split(k_attn, 4)
    attn_params = (
        xavier(kq, (D, D)),
        xavier(kk, (D, D)),
        xavier(kv, (D, D)),
        (jax.random.uniform(km, (D,)) > 0.5).astype(jnp.float32),
    )

    # One-time weight prep (padding, folding, stacking, bf16 cast) -- off the
    # per-call path.  Production default: bf16 MXU operands.
    params = prepare_not_params(mlp_params, attn_params,
                                compute_dtype=jnp.bfloat16)

    out = not_forward(seq, params)
    jax.block_until_ready(out)

    ref = _reference(seq, mlp_params, attn_params)
    assert out.shape == ref.shape
    # Tolerance: bf16 MXU operands (f32 accumulation) plus the approximate EUP
    # reciprocal in the softmax give ~1e-2-level error vs. the pure-f32
    # reference at these magnitudes.  Use compute_dtype=jnp.float32 in
    # prepare_not_params for a bit-tighter match if needed.
    assert jnp.allclose(out, ref, atol=2e-2, rtol=2e-2), "mismatch vs reference"

    print("KERNEL_OK")
</pallas_src>

<mosaic_0001>
module attributes {stable_mosaic.version = 11 : i64} {
  func.func @_not_kernel(%arg0: i32, %arg1: memref<2x8x128xf32, #tpu.memory_space<vmem>>, %arg2: memref<3x128x128xbf16, #tpu.memory_space<vmem>>, %arg3: memref<3x1x128xf32, #tpu.memory_space<vmem>>, %arg4: memref<3x128x128xbf16, #tpu.memory_space<vmem>>, %arg5: memref<3x1x128xf32, #tpu.memory_space<vmem>>, %arg6: memref<128x384xbf16, #tpu.memory_space<vmem>>, %arg7: memref<2x8x128xf32, #tpu.memory_space<vmem>>) attributes {dimension_semantics = [#tpu.dimension_semantics<parallel>], iteration_bounds = array<i64: 1>, scalar_prefetch = 0 : i64, scratch_operands = 0 : i64, tpu.core_type = #tpu.core_type<tc>, window_params = [{transform_indices = @transform_0, window_bounds = array<i64: 2, 8, 128>}, {pipeline_mode = #tpu.pipeline_mode<synchronous>, transform_indices = @transform_1, window_bounds = array<i64: 3, 128, 128>}, {pipeline_mode = #tpu.pipeline_mode<synchronous>, transform_indices = @transform_2, window_bounds = array<i64: 3, 1, 128>}, {pipeline_mode = #tpu.pipeline_mode<synchronous>, transform_indices = @transform_3, window_bounds = array<i64: 3, 128, 128>}, {pipeline_mode = #tpu.pipeline_mode<synchronous>, transform_indices = @transform_4, window_bounds = array<i64: 3, 1, 128>}, {pipeline_mode = #tpu.pipeline_mode<synchronous>, transform_indices = @transform_5, window_bounds = array<i64: 128, 384>}, {transform_indices = @transform_6, window_bounds = array<i64: 2, 8, 128>}]} {
    %c0 = arith.constant 0 : index
    %c0_0 = arith.constant 0 : index
    %c0_1 = arith.constant 0 : index
    %0 = vector.load %arg1[%c0, %c0_0, %c0_1] : memref<2x8x128xf32, #tpu.memory_space<vmem>>, vector<2x8x128xf32>
    %1 = vector.shape_cast %0 : vector<2x8x128xf32> to vector<16x128xf32>
    %2 = arith.truncf %1 : vector<16x128xf32> to vector<16x128xbf16>
    %c0_2 = arith.constant 0 : index
    %c0_3 = arith.constant 0 : index
    %c0_4 = arith.constant 0 : index
    %3 = vector.load %arg2[%c0_2, %c0_3, %c0_4] : memref<3x128x128xbf16, #tpu.memory_space<vmem>>, vector<1x128x128xbf16>
    %4 = vector.shape_cast %3 : vector<1x128x128xbf16> to vector<128x128xbf16>
    %cst = arith.constant dense<0.000000e+00> : vector<16x128xf32>
    %5 = tpu.matmul %2, %4, %cst {dimension_numbers = #tpu.dot_dimension_numbers<[1], [0], [0], [1], [0, 0, 1, 1], [], []>} : vector<16x128xbf16>, vector<128x128xbf16>, vector<16x128xf32> -> vector<16x128xf32>
    %c0_5 = arith.constant 0 : index
    %c0_6 = arith.constant 0 : index
    %c0_7 = arith.constant 0 : index
    %6 = vector.load %arg3[%c0_5, %c0_6, %c0_7] : memref<3x1x128xf32, #tpu.memory_space<vmem>>, vector<1x1x128xf32>
    %7 = vector.shape_cast %6 : vector<1x1x128xf32> to vector<1x128xf32>
    %8 = vector.broadcast %7 : vector<1x128xf32> to vector<16x128xf32>
    %9 = arith.addf %5, %8 : vector<16x128xf32>
    %cst_8 = arith.constant 0.000000e+00 : f32
    %10 = vector.broadcast %cst_8 : f32 to vector<16x128xf32>
    %11 = arith.maximumf %9, %10 : vector<16x128xf32>
    %12 = arith.truncf %11 : vector<16x128xf32> to vector<16x128xbf16>
    %c0_9 = arith.constant 0 : index
    %c0_10 = arith.constant 0 : index
    %c0_11 = arith.constant 0 : index
    %13 = vector.load %arg4[%c0_9, %c0_10, %c0_11] : memref<3x128x128xbf16, #tpu.memory_space<vmem>>, vector<1x128x128xbf16>
    %14 = vector.shape_cast %13 : vector<1x128x128xbf16> to vector<128x128xbf16>
    %cst_12 = arith.constant dense<0.000000e+00> : vector<16x128xf32>
    %15 = tpu.matmul %12, %14, %cst_12 {dimension_numbers = #tpu.dot_dimension_numbers<[1], [0], [0], [1], [0, 0, 1, 1], [], []>} : vector<16x128xbf16>, vector<128x128xbf16>, vector<16x128xf32> -> vector<16x128xf32>
    %16 = arith.addf %1, %15 : vector<16x128xf32>
    %c0_13 = arith.constant 0 : index
    %c0_14 = arith.constant 0 : index
    %c0_15 = arith.constant 0 : index
    %17 = vector.load %arg5[%c0_13, %c0_14, %c0_15] : memref<3x1x128xf32, #tpu.memory_space<vmem>>, vector<1x1x128xf32>
    %18 = vector.shape_cast %17 : vector<1x1x128xf32> to vector<1x128xf32>
    %19 = vector.broadcast %18 : vector<1x128xf32> to vector<16x128xf32>
    %20 = arith.addf %16, %19 : vector<16x128xf32>
    %21 = arith.truncf %20 : vector<16x128xf32> to vector<16x128xbf16>
    %c1 = arith.constant 1 : index
    %c0_16 = arith.constant 0 : index
    %c0_17 = arith.constant 0 : index
    %22 = vector.load %arg2[%c1, %c0_16, %c0_17] : memref<3x128x128xbf16, #tpu.memory_space<vmem>>, vector<1x128x128xbf16>
    %23 = vector.shape_cast %22 : vector<1x128x128xbf16> to vector<128x128xbf16>
    %cst_18 = arith.constant dense<0.000000e+00> : vector<16x128xf32>
    %24 = tpu.matmul %21, %23, %cst_18 {dimension_numbers = #tpu.dot_dimension_numbers<[1], [0], [0], [1], [0, 0, 1, 1], [], []>} : vector<16x128xbf16>, vector<128x128xbf16>, vector<16x128xf32> -> vector<16x128xf32>
    %c1_19 = arith.constant 1 : index
    %c0_20 = arith.constant 0 : index
    %c0_21 = arith.constant 0 : index
    %25 = vector.load %arg3[%c1_19, %c0_20, %c0_21] : memref<3x1x128xf32, #tpu.memory_space<vmem>>, vector<1x1x128xf32>
    %26 = vector.shape_cast %25 : vector<1x1x128xf32> to vector<1x128xf32>
    %27 = vector.broadcast %26 : vector<1x128xf32> to vector<16x128xf32>
    %28 = arith.addf %24, %27 : vector<16x128xf32>
    %cst_22 = arith.constant 0.000000e+00 : f32
    %29 = vector.broadcast %cst_22 : f32 to vector<16x128xf32>
    %30 = arith.maximumf %28, %29 : vector<16x128xf32>
    %31 = arith.truncf %30 : vector<16x128xf32> to vector<16x128xbf16>
    %c1_23 = arith.constant 1 : index
    %c0_24 = arith.constant 0 : index
    %c0_25 = arith.constant 0 : index
    %32 = vector.load %arg4[%c1_23, %c0_24, %c0_25] : memref<3x128x128xbf16, #tpu.memory_space<vmem>>, vector<1x128x128xbf16>
    %33 = vector.shape_cast %32 : vector<1x128x128xbf16> to vector<128x128xbf16>
    %cst_26 = arith.constant dense<0.000000e+00> : vector<16x128xf32>
    %34 = tpu.matmul %31, %33, %cst_26 {dimension_numbers = #tpu.dot_dimension_numbers<[1], [0], [0], [1], [0, 0, 1, 1], [], []>} : vector<16x128xbf16>, vector<128x128xbf16>, vector<16x128xf32> -> vector<16x128xf32>
    %35 = arith.addf %20, %34 : vector<16x128xf32>
    %c1_27 = arith.constant 1 : index
    %c0_28 = arith.constant 0 : index
    %c0_29 = arith.constant 0 : index
    %36 = vector.load %arg5[%c1_27, %c0_28, %c0_29] : memref<3x1x128xf32, #tpu.memory_space<vmem>>, vector<1x1x128xf32>
    %37 = vector.shape_cast %36 : vector<1x1x128xf32> to vector<1x128xf32>
    %38 = vector.broadcast %37 : vector<1x128xf32> to vector<16x128xf32>
    %39 = arith.addf %35, %38 : vector<16x128xf32>
    %40 = arith.truncf %39 : vector<16x128xf32> to vector<16x128xbf16>
    %c0_30 = arith.constant 0 : index
    %c0_31 = arith.constant 0 : index
    %41 = vector.load %arg6[%c0_30, %c0_31] : memref<128x384xbf16, #tpu.memory_space<vmem>>, vector<128x384xbf16>
    %cst_32 = arith.constant dense<0.000000e+00> : vector<16x384xf32>
    %42 = tpu.matmul %40, %41, %cst_32 {dimension_numbers = #tpu.dot_dimension_numbers<[1], [0], [0], [1], [0, 0, 1, 1], [], []>} : vector<16x128xbf16>, vector<128x384xbf16>, vector<16x384xf32> -> vector<16x384xf32>
    %43 = vector.shape_cast %42 : vector<16x384xf32> to vector<2x8x384xf32>
    %44 = vector.extract_strided_slice %43 {offsets = [0, 0, 0], sizes = [2, 8, 128], strides = [1, 1, 1]} : vector<2x8x384xf32> to vector<2x8x128xf32>
    %45 = vector.extract_strided_slice %43 {offsets = [0, 0, 128], sizes = [2, 8, 128], strides = [1, 1, 1]} : vector<2x8x384xf32> to vector<2x8x128xf32>
    %46 = vector.extract_strided_slice %43 {offsets = [0, 0, 256], sizes = [2, 8, 128], strides = [1, 1, 1]} : vector<2x8x384xf32> to vector<2x8x128xf32>
    %47 = arith.truncf %44 : vector<2x8x128xf32> to vector<2x8x128xbf16>
    %48 = arith.truncf %45 : vector<2x8x128xf32> to vector<2x8x128xbf16>
    "tpu.trace_start"() <{level = 10 : i32, message = "bqd,bkd->bqk"}> : () -> ()
    %cst_33 = arith.constant dense<0.000000e+00> : vector<2x8x8xf32>
    %49 = tpu.matmul %47, %48, %cst_33 {dimension_numbers = #tpu.dot_dimension_numbers<[2], [2], [1], [1], [0, 0, 0, 1, 1, 1], [0], [0]>} : vector<2x8x128xbf16>, vector<2x8x128xbf16>, vector<2x8x8xf32> -> vector<2x8x8xf32>
    "tpu.trace_stop"() : () -> ()
    %cst_34 = arith.constant dense<0xFF800000> : vector<2x8xf32>
    %50 = vector.multi_reduction <maximumf>, %49, %cst_34 [2] : vector<2x8x8xf32> to vector<2x8xf32>
    %51 = vector.shape_cast %50 : vector<2x8xf32> to vector<2x8x1xf32>
    %52 = vector.broadcast %51 : vector<2x8x1xf32> to vector<2x8x8xf32>
    %53 = arith.subf %49, %52 : vector<2x8x8xf32>
    %54 = math.exp %53 : vector<2x8x8xf32>
    %cst_35 = arith.constant dense<0.000000e+00> : vector<2x8xf32>
    %55 = vector.multi_reduction <add>, %54, %cst_35 [2] : vector<2x8x8xf32> to vector<2x8xf32>
    %56 = vector.shape_cast %55 : vector<2x8xf32> to vector<2x8x1xf32>
    %57 = tpu.reciprocal %56 {approx = true} : vector<2x8x1xf32> -> vector<2x8x1xf32>
    %58 = vector.broadcast %57 : vector<2x8x1xf32> to vector<2x8x8xf32>
    %59 = arith.mulf %54, %58 : vector<2x8x8xf32>
    %60 = arith.truncf %59 : vector<2x8x8xf32> to vector<2x8x8xbf16>
    %61 = arith.truncf %46 : vector<2x8x128xf32> to vector<2x8x128xbf16>
    "tpu.trace_start"() <{level = 10 : i32, message = "bqk,bkd->bqd"}> : () -> ()
    %cst_36 = arith.constant dense<0.000000e+00> : vector<2x8x128xf32>
    %62 = tpu.matmul %60, %61, %cst_36 {dimension_numbers = #tpu.dot_dimension_numbers<[2], [1], [1], [2], [0, 0, 0, 1, 1, 2], [0], [0]>} : vector<2x8x8xbf16>, vector<2x8x128xbf16>, vector<2x8x128xf32> -> vector<2x8x128xf32>
    "tpu.trace_stop"() : () -> ()
    %63 = vector.shape_cast %39 : vector<16x128xf32> to vector<2x8x128xf32>
    %64 = arith.addf %63, %62 : vector<2x8x128xf32>
    %65 = vector.shape_cast %64 : vector<2x8x128xf32> to vector<16x128xf32>
    %66 = arith.truncf %65 : vector<16x128xf32> to vector<16x128xbf16>
    %c2 = arith.constant 2 : index
    %c0_37 = arith.constant 0 : index
    %c0_38 = arith.constant 0 : index
    %67 = vector.load %arg2[%c2, %c0_37, %c0_38] : memref<3x128x128xbf16, #tpu.memory_space<vmem>>, vector<1x128x128xbf16>
    %68 = vector.shape_cast %67 : vector<1x128x128xbf16> to vector<128x128xbf16>
    %cst_39 = arith.constant dense<0.000000e+00> : vector<16x128xf32>
    %69 = tpu.matmul %66, %68, %cst_39 {dimension_numbers = #tpu.dot_dimension_numbers<[1], [0], [0], [1], [0, 0, 1, 1], [], []>} : vector<16x128xbf16>, vector<128x128xbf16>, vector<16x128xf32> -> vector<16x128xf32>
    %c2_40 = arith.constant 2 : index
    %c0_41 = arith.constant 0 : index
    %c0_42 = arith.constant 0 : index
    %70 = vector.load %arg3[%c2_40, %c0_41, %c0_42] : memref<3x1x128xf32, #tpu.memory_space<vmem>>, vector<1x1x128xf32>
    %71 = vector.shape_cast %70 : vector<1x1x128xf32> to vector<1x128xf32>
    %72 = vector.broadcast %71 : vector<1x128xf32> to vector<16x128xf32>
    %73 = arith.addf %69, %72 : vector<16x128xf32>
    %cst_43 = arith.constant 0.000000e+00 : f32
    %74 = vector.broadcast %cst_43 : f32 to vector<16x128xf32>
    %75 = arith.maximumf %73, %74 : vector<16x128xf32>
    %76 = arith.truncf %75 : vector<16x128xf32> to vector<16x128xbf16>
    %c2_44 = arith.constant 2 : index
    %c0_45 = arith.constant 0 : index
    %c0_46 = arith.constant 0 : index
    %77 = vector.load %arg4[%c2_44, %c0_45, %c0_46] : memref<3x128x128xbf16, #tpu.memory_space<vmem>>, vector<1x128x128xbf16>
    %78 = vector.shape_cast %77 : vector<1x128x128xbf16> to vector<128x128xbf16>
    %cst_47 = arith.constant dense<0.000000e+00> : vector<16x128xf32>
    %79 = tpu.matmul %76, %78, %cst_47 {dimension_numbers = #tpu.dot_dimension_numbers<[1], [0], [0], [1], [0, 0, 1, 1], [], []>} : vector<16x128xbf16>, vector<128x128xbf16>, vector<16x128xf32> -> vector<16x128xf32>
    %80 = arith.addf %65, %79 : vector<16x128xf32>
    %c2_48 = arith.constant 2 : index
    %c0_49 = arith.constant 0 : index
    %c0_50 = arith.constant 0 : index
    %81 = vector.load %arg5[%c2_48, %c0_49, %c0_50] : memref<3x1x128xf32, #tpu.memory_space<vmem>>, vector<1x1x128xf32>
    %82 = vector.shape_cast %81 : vector<1x1x128xf32> to vector<1x128xf32>
    %83 = vector.broadcast %82 : vector<1x128xf32> to vector<16x128xf32>
    %84 = arith.addf %80, %83 : vector<16x128xf32>
    %85 = vector.shape_cast %84 : vector<16x128xf32> to vector<2x8x128xf32>
    %c0_51 = arith.constant 0 : index
    %c0_52 = arith.constant 0 : index
    %c0_53 = arith.constant 0 : index
    %86 = vector.load %arg7[%c0_51, %c0_52, %c0_53] : memref<2x8x128xf32, #tpu.memory_space<vmem>>, vector<2x8x128xf32>
    tpu.vector_store %arg7[%c0_51, %c0_52, %c0_53], %85 {strides = array<i32>} : memref<2x8x128xf32, #tpu.memory_space<vmem>>, vector<2x8x128xf32>,
    return
  }
  func.func @transform_0(%arg0: i32) -> (i32, i32, i32) {
    %c0_i32 = arith.constant 0 : i32
    %c0_i32_0 = arith.constant 0 : i32
    %c0_i32_1 = arith.constant 0 : i32
    return %arg0, %c0_i32, %c0_i32_0 : i32, i32, i32
  }
  func.func @transform_1(%arg0: i32) -> (i32, i32, i32) {
    %c0_i32 = arith.constant 0 : i32
    %c0_i32_0 = arith.constant 0 : i32
    %c0_i32_1 = arith.constant 0 : i32
    %c0_i32_2 = arith.constant 0 : i32
    return %c0_i32, %c0_i32_0, %c0_i32_1 : i32, i32, i32
  }
  func.func @transform_2(%arg0: i32) -> (i32, i32, i32) {
    %c0_i32 = arith.constant 0 : i32
    %c0_i32_0 = arith.constant 0 : i32
    %c0_i32_1 = arith.constant 0 : i32
    %c0_i32_2 = arith.constant 0 : i32
    return %c0_i32, %c0_i32_0, %c0_i32_1 : i32, i32, i32
  }
  func.func @transform_3(%arg0: i32) -> (i32, i32, i32) {
    %c0_i32 = arith.constant 0 : i32
    %c0_i32_0 = arith.constant 0 : i32
    %c0_i32_1 = arith.constant 0 : i32
    %c0_i32_2 = arith.constant 0 : i32
    return %c0_i32, %c0_i32_0, %c0_i32_1 : i32, i32, i32
  }
  func.func @transform_4(%arg0: i32) -> (i32, i32, i32) {
    %c0_i32 = arith.constant 0 : i32
    %c0_i32_0 = arith.constant 0 : i32
    %c0_i32_1 = arith.constant 0 : i32
    %c0_i32_2 = arith.constant 0 : i32
    return %c0_i32, %c0_i32_0, %c0_i32_1 : i32, i32, i32
  }
  func.func @transform_5(%arg0: i32) -> (i32, i32) {
    %c0_i32 = arith.constant 0 : i32
    %c0_i32_0 = arith.constant 0 : i32
    %c0_i32_1 = arith.constant 0 : i32
    return %c0_i32, %c0_i32_0 : i32, i32
  }
  func.func @transform_6(%arg0: i32) -> (i32, i32, i32) {
    %c0_i32 = arith.constant 0 : i32
    %c0_i32_0 = arith.constant 0 : i32
    %c0_i32_1 = arith.constant 0 : i32
    return %arg0, %c0_i32, %c0_i32_0 : i32, i32, i32
  }
}

</mosaic_0001>

<llo_original>
// kernel: tpu_custom_call.1
$region0: #{tpu_custom_call.1}
  #allocation0 [shape = 'u32[]', space=smem, size = 0x4, offset = 0x4, fixed_abs, tag = 'smem constant byte address 0x4 - core index']
  #allocation1 [shape = 'u32[144,128]{1,0:T(1,128)}', space=vmem, size = 0x12000, scoped, tag = 'internal scratch']
  %s0 = inlined_call_operand.hbm [shape: f32[2,8,128], index: 0, kind: input, shape index: {}]
  %s1 = inlined_call_operand.hbm [shape: bf16[3,128,128], index: 1, kind: input, shape index: {}]
  %s2 = inlined_call_operand.vmem [shape: f32[3,1,128], index: 2, kind: input, shape index: {}]
  %s3 = inlined_call_operand.hbm [shape: bf16[3,128,128], index: 3, kind: input, shape index: {}]
  %s4 = inlined_call_operand.vmem [shape: f32[3,1,128], index: 4, kind: input, shape index: {}]
  %s5 = inlined_call_operand.hbm [shape: bf16[128,384], index: 5, kind: input, shape index: {}]
  %s6 = inlined_call_operand.hbm [shape: f32[2,8,128], index: 6, kind: output, shape index: {}]
  %s7 = sld [smem:[#allocation0]]
  $region50: #{tpu_custom_call.1} parent=0
    _
  %s9 = ssub.s32 1, %s7
  %s10 = scalar_select 0, %s9, %s7
  $region1: #{tpu_custom_call.1} parent=0
    #allocation2 [shape = 'u8[8192]{0}', space=vmem, size = 0x2000, scoped, tag = 'input window, operand 0, single buffered']
    #allocation3 [shape = 's32[1]{0}', space=sflag, size = 0x4, scoped, tag = 'scoped memory for tpu_custom_call.1']
    #allocation4 [shape = 's32[1]{0}', space=sflag, size = 0x4, scoped, tag = 'scoped memory for tpu_custom_call.1']
    #allocation5 [shape = 'u8[98304]{0}', space=vmem, size = 0x18000, scoped, tag = 'input window, operand 1, single buffered']
    #allocation6 [shape = 's32[1]{0}', space=sflag, size = 0x4, scoped, tag = 'scoped memory for tpu_custom_call.1']
    #allocation7 [shape = 'u8[98304]{0}', space=vmem, size = 0x18000, scoped, tag = 'input window, operand 3, single buffered']
    #allocation8 [shape = 'u8[98304]{0}', space=vmem, size = 0x18000, scoped, tag = 'input window, operand 5, single buffered']
    #allocation9 [shape = 's32[1]{0}', space=sflag, size = 0x4, scoped, tag = 'scoped memory for tpu_custom_call.1']
    #allocation10 [shape = 'u8[8192]{0}', space=vmem, size = 0x2000, scoped, tag = 'output window, operand 0, single buffered']
    %11 = vsyncpa [#allocation3], 0
    %12 = vsyncpa [#allocation6], 0
    %13 = vsyncpa [#allocation9], 0
    %14 = vsyncpa [#allocation4], 0
    // Predicated region
    $region2: #{tpu_custom_call.1} parent=1 // pred_check
      _
    $region3: #{tpu_custom_call.1} parent=1 // pred_check_branch
      %16 = sbr.rel (0) target = $region5
    $region4: #{tpu_custom_call.1} parent=1 // pred_region
      %s18 = ssub.s32 256, 256
      %19 = vsyncadd [#allocation3], %s18
      %s20 = sshll.u32 [#allocation2], 4
      %s21 = int_to_ptr.vmem [resolvable:$true] %s20
      %26 = dma.hbm_to_vmem [thread:$0]  %s0, 256, %s21, [#allocation3], 128, 128, 8
    $region5: #{tpu_custom_call.1} parent=1 // pred_fallthru
      _
    // Predicated region
    $region6: #{tpu_custom_call.1} parent=1 // pred_check
      _
    $region7: #{tpu_custom_call.1} parent=1 // pred_check_branch
      %28 = sbr.rel (0) target = $region9
    $region8: #{tpu_custom_call.1} parent=1 // pred_region
      %s30 = ssub.s32 3072, 3072
      %31 = vsyncadd [#allocation6], %s30
      %s32 = sshll.u32 [#allocation5], 4
      %s33 = int_to_ptr.vmem [resolvable:$true] %s32
      %38 = dma.hbm_to_vmem [thread:$0]  %s1, 3072, %s33, [#allocation6], 64, 64, 4
    $region9: #{tpu_custom_call.1} parent=1 // pred_fallthru
      _
    // Predicated region
    $region10: #{tpu_custom_call.1} parent=1 // pred_check
      _
    $region11: #{tpu_custom_call.1} parent=1 // pred_check_branch
      %40 = sbr.rel (0) target = $region13
    $region12: #{tpu_custom_call.1} parent=1 // pred_region
      _
    $region13: #{tpu_custom_call.1} parent=1 // pred_fallthru
      _
    // Predicated region
    $region14: #{tpu_custom_call.1} parent=1 // pred_check
      _
    $region15: #{tpu_custom_call.1} parent=1 // pred_check_branch
      %42 = sbr.rel (0) target = $region17
    $region16: #{tpu_custom_call.1} parent=1 // pred_region
      %s44 = ssub.s32 3072, 3072
      %45 = vsyncadd [#allocation6], %s44
      %s46 = sshll.u32 [#allocation7], 4
      %s47 = int_to_ptr.vmem [resolvable:$true] %s46
      %52 = dma.hbm_to_vmem [thread:$0]  %s3, 3072, %s47, [#allocation6], 64, 64, 4
    $region17: #{tpu_custom_call.1} parent=1 // pred_fallthru
      _
    // Predicated region
    $region18: #{tpu_custom_call.1} parent=1 // pred_check
      _
    $region19: #{tpu_custom_call.1} parent=1 // pred_check_branch
      %54 = sbr.rel (0) target = $region21
    $region20: #{tpu_custom_call.1} parent=1 // pred_region
      _
    $region21: #{tpu_custom_call.1} parent=1 // pred_fallthru
      _
    // Predicated region
    $region22: #{tpu_custom_call.1} parent=1 // pred_check
      _
    $region23: #{tpu_custom_call.1} parent=1 // pred_check_branch
      %56 = sbr.rel (0) target = $region25
    $region24: #{tpu_custom_call.1} parent=1 // pred_region
      %s58 = ssub.s32 3072, 3072
      %59 = vsyncadd [#allocation9], %s58
      %s60 = sshll.u32 [#allocation8], 4
      %s61 = int_to_ptr.vmem [resolvable:$true] %s60
      %66 = dma.hbm_to_vmem [thread:$0]  %s5, 3072, %s61, [#allocation9], 192, 192, 12
    $region25: #{tpu_custom_call.1} parent=1 // pred_fallthru
      _
    // Predicated region
    $region26: #{tpu_custom_call.1} parent=1 // pred_check
      _
    $region27: #{tpu_custom_call.1} parent=1 // pred_check_branch
      %68 = sbr.rel (0) target = $region29
    $region28: #{tpu_custom_call.1} parent=1 // pred_region
      %69 = dma.done [#allocation3], 256
    $region29: #{tpu_custom_call.1} parent=1 // pred_fallthru
      _
    // Predicated region
    $region30: #{tpu_custom_call.1} parent=1 // pred_check
      _
    $region31: #{tpu_custom_call.1} parent=1 // pred_check_branch
      %71 = sbr.rel (0) target = $region33
    $region32: #{tpu_custom_call.1} parent=1 // pred_region
      %72 = dma.done [#allocation6], 3072
    $region33: #{tpu_custom_call.1} parent=1 // pred_fallthru
      _
    // Predicated region
    $region34: #{tpu_custom_call.1} parent=1 // pred_check
      _
    $region35: #{tpu_custom_call.1} parent=1 // pred_check_branch
      %74 = sbr.rel (0) target = $region37
    $region36: #{tpu_custom_call.1} parent=1 // pred_region
      %75 = dma.done [#allocation6], 3072
    $region37: #{tpu_custom_call.1} parent=1 // pred_fallthru
      _
    // Predicated region
    $region38: #{tpu_custom_call.1} parent=1 // pred_check
      _
    $region39: #{tpu_custom_call.1} parent=1 // pred_check_branch
      %77 = sbr.rel (0) target = $region41
    $region40: #{tpu_custom_call.1} parent=1 // pred_region
      %78 = dma.done [#allocation9], 3072
    $region41: #{tpu_custom_call.1} parent=1 // pred_fallthru
      _
    %v80 = vld [vmem:[#allocation2] sm:$0xff]
    %v81 = vld [vmem:[#allocation2 + $0x8] sm:$0xff]
    %v82 = vpack.c.bf16 %v81, %v80
    %v83 = vld [vmem:[#allocation5] sm:$0xf]
    %v84 = vld [vmem:[#allocation5 + $0x4] sm:$0xf]
    %v85 = vld [vmem:[#allocation5 + $0x8] sm:$0xf]
    %v86 = vld [vmem:[#allocation5 + $0xc] sm:$0xf]
    %v87 = vld [vmem:[#allocation5 + $0x10] sm:$0xf]
    %v88 = vld [vmem:[#allocation5 + $0x14] sm:$0xf]
    %v89 = vld [vmem:[#allocation5 + $0x18] sm:$0xf]
    %v90 = vld [vmem:[#allocation5 + $0x1c] sm:$0xf]
    %v91 = vld [vmem:[#allocation5 + $0x20] sm:$0xf]
    %v92 = vld [vmem:[#allocation5 + $0x24] sm:$0xf]
    %v93 = vld [vmem:[#allocation5 + $0x28] sm:$0xf]
    %v94 = vld [vmem:[#allocation5 + $0x2c] sm:$0xf]
    %v95 = vld [vmem:[#allocation5 + $0x30] sm:$0xf]
    %v96 = vld [vmem:[#allocation5 + $0x34] sm:$0xf]
    %v97 = vld [vmem:[#allocation5 + $0x38] sm:$0xf]
    %v98 = vld [vmem:[#allocation5 + $0x3c] sm:$0xf]
    %v99 = vld [vmem:[%s2] sm:$0x1]
    %v101 = vlaneseq
    %v102 = vshrl.u32 %v101, 7
    %v103 = vsub.s32 0, %v102
    %v104 = vrot.slane %v99, %v103
    %v122 = vunpack.c.l.b16 %v83
    %v123 = vunpack.c.l.b16 %v84
    %v124 = vunpack.c.l.b16 %v85
    %v125 = vunpack.c.l.b16 %v86
    %v126 = vunpack.c.l.b16 %v87
    %v127 = vunpack.c.l.b16 %v88
    %v128 = vunpack.c.l.b16 %v89
    %v129 = vunpack.c.l.b16 %v90
    %v130 = vunpack.c.l.b16 %v91
    %v131 = vunpack.c.l.b16 %v92
    %v132 = vunpack.c.l.b16 %v93
    %v133 = vunpack.c.l.b16 %v94
    %v134 = vunpack.c.l.b16 %v95
    %v135 = vunpack.c.l.b16 %v96
    %v136 = vunpack.c.l.b16 %v97
    %v137 = vunpack.c.l.b16 %v98
    %v138 = vpack.c.b16 %v123, %v122
    %v139 = vpack.c.b16 %v125, %v124
    %v140 = vpack.c.b16 %v127, %v126
    %v141 = vpack.c.b16 %v129, %v128
    %v142 = vpack.c.b16 %v131, %v130
    %v143 = vpack.c.b16 %v133, %v132
    %v144 = vpack.c.b16 %v135, %v134
    %v145 = vpack.c.b16 %v137, %v136
    %154 = vmatprep.subr.bf16.mxu0 0
    %155 = vmatpush1.bf16.msra.mxu0 %v145
    %156 = vmatprep.subr.bf16.mxu0 0
    %157 = vmatpush1.bf16.msra.mxu0 %v144
    %158 = vmatprep.subr.bf16.mxu0 0
    %159 = vmatpush1.bf16.msra.mxu0 %v143
    %160 = vmatprep.subr.bf16.mxu0 0
    %161 = vmatpush1.bf16.msra.mxu0 %v142
    %162 = vmatprep.subr.bf16.mxu0 0
    %163 = vmatpush1.bf16.msra.mxu0 %v141
    %164 = vmatprep.subr.bf16.mxu0 0
    %165 = vmatpush1.bf16.msra.mxu0 %v140
    %166 = vmatprep.subr.bf16.mxu0 0
    %167 = vmatpush1.bf16.msra.mxu0 %v139
    %168 = vmatprep.subr.bf16.mxu0 0
    %169 = vmatpush1.bf16.msra.mxu0 %v138
    %170 = vmatprep.subr.bf16.mxu0 0
    %171 = vmatpush2.bf16.msra.mxu0 0
    %172 = vmatprep.subr.bf16.mxu0 0
    %173 = vmatpush2.bf16.msra.mxu0 0
    %174 = vmatprep.subr.bf16.mxu0 0
    %175 = vmatpush2.bf16.msra.mxu0 0
    %176 = vmatprep.subr.bf16.mxu0 0
    %177 = vmatpush2.bf16.msra.mxu0 0
    %178 = vmatprep.subr.bf16.mxu0 0
    %179 = vmatpush2.bf16.msra.mxu0 0
    %180 = vmatprep.subr.bf16.mxu0 0
    %181 = vmatpush2.bf16.msra.mxu0 0
    %182 = vmatprep.subr.bf16.mxu0 0
    %183 = vmatpush2.bf16.msra.mxu0 0
    %184 = vmatprep.subr.bf16.mxu0 0
    %185 = vmatpush2.bf16.msra.mxu0 0
    %186 = vmatprep.mubr.bf16.mxu0 0
    %187 = vmatmul.mubr.bf16.gmra.mxu0 %v82
    %v188 = vpop.f32.mrf.mxu0
    %v189 = vadd.f32 %v104, %v188
    %v190 = vpop.f32.mrf.mxu0
    %v191 = vpop.f32.mrf.mxu0
    %v192 = vadd.f32 %v104, %v191
    %v193 = vpop.f32.mrf.mxu0
    %194 = vdwg.mxu0
    %v195 = vmax.f32 %v189, 0.0
    %v196 = vmax.f32 %v192, 0.0
    %v197 = vpack.c.bf16 %v196, %v195
    %v198 = vld [vmem:[#allocation7] sm:$0xf]
    %v199 = vld [vmem:[#allocation7 + $0x4] sm:$0xf]
    %v200 = vld [vmem:[#allocation7 + $0x8] sm:$0xf]
    %v201 = vld [vmem:[#allocation7 + $0xc] sm:$0xf]
    %v202 = vld [vmem:[#allocation7 + $0x10] sm:$0xf]
    %v203 = vld [vmem:[#allocation7 + $0x14] sm:$0xf]
    %v204 = vld [vmem:[#allocation7 + $0x18] sm:$0xf]
    %v205 = vld [vmem:[#allocation7 + $0x1c] sm:$0xf]
    %v206 = vld [vmem:[#allocation7 + $0x20] sm:$0xf]
    %v207 = vld [vmem:[#allocation7 + $0x24] sm:$0xf]
    %v208 = vld [vmem:[#allocation7 + $0x28] sm:$0xf]
    %v209 = vld [vmem:[#allocation7 + $0x2c] sm:$0xf]
    %v210 = vld [vmem:[#allocation7 + $0x30] sm:$0xf]
    %v211 = vld [vmem:[#allocation7 + $0x34] sm:$0xf]
    %v212 = vld [vmem:[#allocation7 + $0x38] sm:$0xf]
    %v213 = vld [vmem:[#allocation7 + $0x3c] sm:$0xf]
    %v230 = vunpack.c.l.b16 %v198
    %v231 = vunpack.c.l.b16 %v199
    %v232 = vunpack.c.l.b16 %v200
    %v233 = vunpack.c.l.b16 %v201
    %v234 = vunpack.c.l.b16 %v202
    %v235 = vunpack.c.l.b16 %v203
    %v236 = vunpack.c.l.b16 %v204
    %v237 = vunpack.c.l.b16 %v205
    %v238 = vunpack.c.l.b16 %v206
    %v239 = vunpack.c.l.b16 %v207
    %v240 = vunpack.c.l.b16 %v208
    %v241 = vunpack.c.l.b16 %v209
    %v242 = vunpack.c.l.b16 %v210
    %v243 = vunpack.c.l.b16 %v211
    %v244 = vunpack.c.l.b16 %v212
    %v245 = vunpack.c.l.b16 %v213
    %v246 = vpack.c.b16 %v231, %v230
    %v247 = vpack.c.b16 %v233, %v232
    %v248 = vpack.c.b16 %v235, %v234
    %v249 = vpack.c.b16 %v237, %v236
    %v250 = vpack.c.b16 %v239, %v238
    %v251 = vpack.c.b16 %v241, %v240
    %v252 = vpack.c.b16 %v243, %v242
    %v253 = vpack.c.b16 %v245, %v244
    %262 = vmatprep.subr.bf16.mxu0 0
    %263 = vmatpush1.bf16.msra.mxu0 %v253
    %264 = vmatprep.subr.bf16.mxu0 0
    %265 = vmatpush1.bf16.msra.mxu0 %v252
    %266 = vmatprep.subr.bf16.mxu0 0
    %267 = vmatpush1.bf16.msra.mxu0 %v251
    %268 = vmatprep.subr.bf16.mxu0 0
    %269 = vmatpush1.bf16.msra.mxu0 %v250
    %270 = vmatprep.subr.bf16.mxu0 0
    %271 = vmatpush1.bf16.msra.mxu0 %v249
    %272 = vmatprep.subr.bf16.mxu0 0
    %273 = vmatpush1.bf16.msra.mxu0 %v248
    %274 = vmatprep.subr.bf16.mxu0 0
    %275 = vmatpush1.bf16.msra.mxu0 %v247
    %276 = vmatprep.subr.bf16.mxu0 0
    %277 = vmatpush1.bf16.msra.mxu0 %v246
    %278 = vmatprep.subr.bf16.mxu0 0
    %279 = vmatpush2.bf16.msra.mxu0 0
    %280 = vmatprep.subr.bf16.mxu0 0
    %281 = vmatpush2.bf16.msra.mxu0 0
    %282 = vmatprep.subr.bf16.mxu0 0
    %283 = vmatpush2.bf16.msra.mxu0 0
    %284 = vmatprep.subr.bf16.mxu0 0
    %285 = vmatpush2.bf16.msra.mxu0 0
    %286 = vmatprep.subr.bf16.mxu0 0
    %287 = vmatpush2.bf16.msra.mxu0 0
    %288 = vmatprep.subr.bf16.mxu0 0
    %289 = vmatpush2.bf16.msra.mxu0 0
    %290 = vmatprep.subr.bf16.mxu0 0
    %291 = vmatpush2.bf16.msra.mxu0 0
    %292 = vmatprep.subr.bf16.mxu0 0
    %293 = vmatpush2.bf16.msra.mxu0 0
    %294 = vmatprep.mubr.bf16.mxu0 0
    %295 = vmatmul.mubr.bf16.gmra.mxu0 %v197
    %v296 = vpop.f32.mrf.mxu0
    %v297 = vadd.f32 0.0, %v296
    %v298 = vpop.f32.mrf.mxu0
    %v299 = vpop.f32.mrf.mxu0
    %v300 = vadd.f32 0.0, %v299
    %v301 = vpop.f32.mrf.mxu0
    %302 = vdwg.mxu0
    %v303 = vadd.f32 %v80, %v297
    %v304 = vadd.f32 %v81, %v300
    %v305 = vld [vmem:[%s4] sm:$0x1]
    %v307 = vlaneseq
    %v308 = vshrl.u32 %v307, 7
    %v309 = vsub.s32 0, %v308
    %v310 = vrot.slane %v305, %v309
    %v312 = vadd.f32 %v303, %v310
    %v313 = vadd.f32 %v304, %v310
    %v314 = vpack.c.bf16 %v313, %v312
    %s315 = scalar_lea.vmem [#allocation5], 64
    %v316 = vld [vmem:[%s315] sm:$0xf]
    %v317 = vld [vmem:[%s315 + $0x4] sm:$0xf]
    %v318 = vld [vmem:[%s315 + $0x8] sm:$0xf]
    %v319 = vld [vmem:[%s315 + $0xc] sm:$0xf]
    %v320 = vld [vmem:[%s315 + $0x10] sm:$0xf]
    %v321 = vld [vmem:[%s315 + $0x14] sm:$0xf]
    %v322 = vld [vmem:[%s315 + $0x18] sm:$0xf]
    %v323 = vld [vmem:[%s315 + $0x1c] sm:$0xf]
    %v324 = vld [vmem:[%s315 + $0x20] sm:$0xf]
    %v325 = vld [vmem:[%s315 + $0x24] sm:$0xf]
    %v326 = vld [vmem:[%s315 + $0x28] sm:$0xf]
    %v327 = vld [vmem:[%s315 + $0x2c] sm:$0xf]
    %v328 = vld [vmem:[%s315 + $0x30] sm:$0xf]
    %v329 = vld [vmem:[%s315 + $0x34] sm:$0xf]
    %v330 = vld [vmem:[%s315 + $0x38] sm:$0xf]
    %v331 = vld [vmem:[%s315 + $0x3c] sm:$0xf]
    %s332 = scalar_lea.vmem %s2, 1
    %v333 = vld [vmem:[%s332] sm:$0x1]
    %v335 = vlaneseq
    %v336 = vshrl.u32 %v335, 7
    %v337 = vsub.s32 0, %v336
    %v338 = vrot.slane %v333, %v337
    %v356 = vunpack.c.l.b16 %v316
    %v357 = vunpack.c.l.b16 %v317
    %v358 = vunpack.c.l.b16 %v318
    %v359 = vunpack.c.l.b16 %v319
    %v360 = vunpack.c.l.b16 %v320
    %v361 = vunpack.c.l.b16 %v321
    %v362 = vunpack.c.l.b16 %v322
    %v363 = vunpack.c.l.b16 %v323
    %v364 = vunpack.c.l.b16 %v324
    %v365 = vunpack.c.l.b16 %v325
    %v366 = vunpack.c.l.b16 %v326
    %v367 = vunpack.c.l.b16 %v327
    %v368 = vunpack.c.l.b16 %v328
    %v369 = vunpack.c.l.b16 %v329
    %v370 = vunpack.c.l.b16 %v330
    %v371 = vunpack.c.l.b16 %v331
    %v372 = vpack.c.b16 %v357, %v356
    %v373 = vpack.c.b16 %v359, %v358
    %v374 = vpack.c.b16 %v361, %v360
    %v375 = vpack.c.b16 %v363, %v362
    %v376 = vpack.c.b16 %v365, %v364
    %v377 = vpack.c.b16 %v367, %v366
    %v378 = vpack.c.b16 %v369, %v368
    %v379 = vpack.c.b16 %v371, %v370
    %388 = vmatprep.subr.bf16.mxu0 0
    %389 = vmatpush1.bf16.msra.mxu0 %v379
    %390 = vmatprep.subr.bf16.mxu0 0
    %391 = vmatpush1.bf16.msra.mxu0 %v378
    %392 = vmatprep.subr.bf16.mxu0 0
    %393 = vmatpush1.bf16.msra.mxu0 %v377
    %394 = vmatprep.subr.bf16.mxu0 0
    %395 = vmatpush1.bf16.msra.mxu0 %v376
    %396 = vmatprep.subr.bf16.mxu0 0
    %397 = vmatpush1.bf16.msra.mxu0 %v375
    %398 = vmatprep.subr.bf16.mxu0 0
    %399 = vmatpush1.bf16.msra.mxu0 %v374
    %400 = vmatprep.subr.bf16.mxu0 0
    %401 = vmatpush1.bf16.msra.mxu0 %v373
    %402 = vmatprep.subr.bf16.mxu0 0
    %403 = vmatpush1.bf16.msra.mxu0 %v372
    %404 = vmatprep.subr.bf16.mxu0 0
    %405 = vmatpush2.bf16.msra.mxu0 0
    %406 = vmatprep.subr.bf16.mxu0 0
    %407 = vmatpush2.bf16.msra.mxu0 0
    %408 = vmatprep.subr.bf16.mxu0 0
    %409 = vmatpush2.bf16.msra.mxu0 0
    %410 = vmatprep.subr.bf16.mxu0 0
    %411 = vmatpush2.bf16.msra.mxu0 0
    %412 = vmatprep.subr.bf16.mxu0 0
    %413 = vmatpush2.bf16.msra.mxu0 0
    %414 = vmatprep.subr.bf16.mxu0 0
    %415 = vmatpush2.bf16.msra.mxu0 0
    %416 = vmatprep.subr.bf16.mxu0 0
    %417 = vmatpush2.bf16.msra.mxu0 0
    %418 = vmatprep.subr.bf16.mxu0 0
    %419 = vmatpush2.bf16.msra.mxu0 0
    %420 = vmatprep.mubr.bf16.mxu0 0
    %421 = vmatmul.mubr.bf16.gmra.mxu0 %v314
    %v422 = vpop.f32.mrf.mxu0
    %v423 = vadd.f32 %v338, %v422
    %v424 = vpop.f32.mrf.mxu0
    %v425 = vpop.f32.mrf.mxu0
    %v426 = vadd.f32 %v338, %v425
    %v427 = vpop.f32.mrf.mxu0
    %428 = vdwg.mxu0
    %v429 = vmax.f32 %v423, 0.0
    %v430 = vmax.f32 %v426, 0.0
    %v431 = vpack.c.bf16 %v430, %v429
    %s432 = scalar_lea.vmem [#allocation7], 64
    %v433 = vld [vmem:[%s432] sm:$0xf]
    %v434 = vld [vmem:[%s432 + $0x4] sm:$0xf]
    %v435 = vld [vmem:[%s432 + $0x8] sm:$0xf]
    %v436 = vld [vmem:[%s432 + $0xc] sm:$0xf]
    %v437 = vld [vmem:[%s432 + $0x10] sm:$0xf]
    %v438 = vld [vmem:[%s432 + $0x14] sm:$0xf]
    %v439 = vld [vmem:[%s432 + $0x18] sm:$0xf]
    %v440 = vld [vmem:[%s432 + $0x1c] sm:$0xf]
    %v441 = vld [vmem:[%s432 + $0x20] sm:$0xf]
    %v442 = vld [vmem:[%s432 + $0x24] sm:$0xf]
    %v443 = vld [vmem:[%s432 + $0x28] sm:$0xf]
    %v444 = vld [vmem:[%s432 + $0x2c] sm:$0xf]
    %v445 = vld [vmem:[%s432 + $0x30] sm:$0xf]
    %v446 = vld [vmem:[%s432 + $0x34] sm:$0xf]
    %v447 = vld [vmem:[%s432 + $0x38] sm:$0xf]
    %v448 = vld [vmem:[%s432 + $0x3c] sm:$0xf]
    %v465 = vunpack.c.l.b16 %v433
    %v466 = vunpack.c.l.b16 %v434
    %v467 = vunpack.c.l.b16 %v435
    %v468 = vunpack.c.l.b16 %v436
    %v469 = vunpack.c.l.b16 %v437
    %v470 = vunpack.c.l.b16 %v438
    %v471 = vunpack.c.l.b16 %v439
    %v472 = vunpack.c.l.b16 %v440
    %v473 = vunpack.c.l.b16 %v441
    %v474 = vunpack.c.l.b16 %v442
    %v475 = vunpack.c.l.b16 %v443
    %v476 = vunpack.c.l.b16 %v444
    %v477 = vunpack.c.l.b16 %v445
    %v478 = vunpack.c.l.b16 %v446
    %v479 = vunpack.c.l.b16 %v447
    %v480 = vunpack.c.l.b16 %v448
    %v481 = vpack.c.b16 %v466, %v465
    %v482 = vpack.c.b16 %v468, %v467
    %v483 = vpack.c.b16 %v470, %v469
    %v484 = vpack.c.b16 %v472, %v471
    %v485 = vpack.c.b16 %v474, %v473
    %v486 = vpack.c.b16 %v476, %v475
    %v487 = vpack.c.b16 %v478, %v477
    %v488 = vpack.c.b16 %v480, %v479
    %497 = vmatprep.subr.bf16.mxu0 0
    %498 = vmatpush1.bf16.msra.mxu0 %v488
    %499 = vmatprep.subr.bf16.mxu0 0
    %500 = vmatpush1.bf16.msra.mxu0 %v487
    %501 = vmatprep.subr.bf16.mxu0 0
    %502 = vmatpush1.bf16.msra.mxu0 %v486
    %503 = vmatprep.subr.bf16.mxu0 0
    %504 = vmatpush1.bf16.msra.mxu0 %v485
    %505 = vmatprep.subr.bf16.mxu0 0
    %506 = vmatpush1.bf16.msra.mxu0 %v484
    %507 = vmatprep.subr.bf16.mxu0 0
    %508 = vmatpush1.bf16.msra.mxu0 %v483
    %509 = vmatprep.subr.bf16.mxu0 0
    %510 = vmatpush1.bf16.msra.mxu0 %v482
    %511 = vmatprep.subr.bf16.mxu0 0
    %512 = vmatpush1.bf16.msra.mxu0 %v481
    %513 = vmatprep.subr.bf16.mxu0 0
    %514 = vmatpush2.bf16.msra.mxu0 0
    %515 = vmatprep.subr.bf16.mxu0 0
    %516 = vmatpush2.bf16.msra.mxu0 0
    %517 = vmatprep.subr.bf16.mxu0 0
    %518 = vmatpush2.bf16.msra.mxu0 0
    %519 = vmatprep.subr.bf16.mxu0 0
    %520 = vmatpush2.bf16.msra.mxu0 0
    %521 = vmatprep.subr.bf16.mxu0 0
    %522 = vmatpush2.bf16.msra.mxu0 0
    %523 = vmatprep.subr.bf16.mxu0 0
    %524 = vmatpush2.bf16.msra.mxu0 0
    %525 = vmatprep.subr.bf16.mxu0 0
    %526 = vmatpush2.bf16.msra.mxu0 0
    %527 = vmatprep.subr.bf16.mxu0 0
    %528 = vmatpush2.bf16.msra.mxu0 0
    %529 = vmatprep.mubr.bf16.mxu0 0
    %530 = vmatmul.mubr.bf16.gmra.mxu0 %v431
    %v531 = vpop.f32.mrf.mxu0
    %v532 = vadd.f32 0.0, %v531
    %v533 = vpop.f32.mrf.mxu0
    %v534 = vpop.f32.mrf.mxu0
    %v535 = vadd.f32 0.0, %v534
    %v536 = vpop.f32.mrf.mxu0
    %537 = vdwg.mxu0
    %v538 = vadd.f32 %v312, %v532
    %v539 = vadd.f32 %v313, %v535
    %s540 = scalar_lea.vmem %s4, 1
    %v541 = vld [vmem:[%s540] sm:$0x1]
    %v543 = vlaneseq
    %v544 = vshrl.u32 %v543, 7
    %v545 = vsub.s32 0, %v544
    %v546 = vrot.slane %v541, %v545
    %v548 = vadd.f32 %v538, %v546
    %v549 = vadd.f32 %v539, %v546
    %v550 = vpack.c.bf16 %v549, %v548
    %v551 = vld [vmem:[#allocation8] sm:$0xff]
    %v552 = vld [vmem:[#allocation8 + $0x8] sm:$0xf]
    %v553 = vld [vmem:[#allocation8 + $0xc] sm:$0xff]
    %v554 = vld [vmem:[#allocation8 + $0x14] sm:$0xf]
    %v555 = vld [vmem:[#allocation8 + $0x18] sm:$0xff]
    %v556 = vld [vmem:[#allocation8 + $0x20] sm:$0xf]
    %v557 = vld [vmem:[#allocation8 + $0x24] sm:$0xff]
    %v558 = vld [vmem:[#allocation8 + $0x2c] sm:$0xf]
    %v559 = vld [vmem:[#allocation8 + $0x30] sm:$0xff]
    %v560 = vld [vmem:[#allocation8 + $0x38] sm:$0xf]
    %v561 = vld [vmem:[#allocation8 + $0x3c] sm:$0xff]
    %v562 = vld [vmem:[#allocation8 + $0x44] sm:$0xf]
    %v563 = vld [vmem:[#allocation8 + $0x48] sm:$0xff]
    %v564 = vld [vmem:[#allocation8 + $0x50] sm:$0xf]
    %v565 = vld [vmem:[#allocation8 + $0x54] sm:$0xff]
    %v566 = vld [vmem:[#allocation8 + $0x5c] sm:$0xf]
    %v567 = vld [vmem:[#allocation8 + $0x60] sm:$0xff]
    %v568 = vld [vmem:[#allocation8 + $0x68] sm:$0xf]
    %v569 = vld [vmem:[#allocation8 + $0x6c] sm:$0xff]
    %v570 = vld [vmem:[#allocation8 + $0x74] sm:$0xf]
    %v571 = vld [vmem:[#allocation8 + $0x78] sm:$0xff]
    %v572 = vld [vmem:[#allocation8 + $0x80] sm:$0xf]
    %v573 = vld [vmem:[#allocation8 + $0x84] sm:$0xff]
    %v574 = vld [vmem:[#allocation8 + $0x8c] sm:$0xf]
    %v575 = vld [vmem:[#allocation8 + $0x90] sm:$0xff]
    %v576 = vld [vmem:[#allocation8 + $0x98] sm:$0xf]
    %v577 = vld [vmem:[#allocation8 + $0x9c] sm:$0xff]
    %v578 = vld [vmem:[#allocation8 + $0xa4] sm:$0xf]
    %v579 = vld [vmem:[#allocation8 + $0xa8] sm:$0xff]
    %v580 = vld [vmem:[#allocation8 + $0xb0] sm:$0xf]
    %v581 = vld [vmem:[#allocation8 + $0xb4] sm:$0xff]
    %v582 = vld [vmem:[#allocation8 + $0xbc] sm:$0xf]
    %v615 = vunpack.c.l.b16 %v551
    %v616 = vunpack.c.h.b16 %v551
    %v617 = vunpack.c.l.b16 %v552
    %v618 = vunpack.c.l.b16 %v553
    %v619 = vunpack.c.h.b16 %v553
    %v620 = vunpack.c.l.b16 %v554
    %v621 = vunpack.c.l.b16 %v555
    %v622 = vunpack.c.h.b16 %v555
    %v623 = vunpack.c.l.b16 %v556
    %v624 = vunpack.c.l.b16 %v557
    %v625 = vunpack.c.h.b16 %v557
    %v626 = vunpack.c.l.b16 %v558
    %v627 = vunpack.c.l.b16 %v559
    %v628 = vunpack.c.h.b16 %v559
    %v629 = vunpack.c.l.b16 %v560
    %v630 = vunpack.c.l.b16 %v561
    %v631 = vunpack.c.h.b16 %v561
    %v632 = vunpack.c.l.b16 %v562
    %v633 = vunpack.c.l.b16 %v563
    %v634 = vunpack.c.h.b16 %v563
    %v635 = vunpack.c.l.b16 %v564
    %v636 = vunpack.c.l.b16 %v565
    %v637 = vunpack.c.h.b16 %v565
    %v638 = vunpack.c.l.b16 %v566
    %v639 = vunpack.c.l.b16 %v567
    %v640 = vunpack.c.h.b16 %v567
    %v641 = vunpack.c.l.b16 %v568
    %v642 = vunpack.c.l.b16 %v569
    %v643 = vunpack.c.h.b16 %v569
    %v644 = vunpack.c.l.b16 %v570
    %v645 = vunpack.c.l.b16 %v571
    %v646 = vunpack.c.h.b16 %v571
    %v647 = vunpack.c.l.b16 %v572
    %v648 = vunpack.c.l.b16 %v573
    %v649 = vunpack.c.h.b16 %v573
    %v650 = vunpack.c.l.b16 %v574
    %v651 = vunpack.c.l.b16 %v575
    %v652 = vunpack.c.h.b16 %v575
    %v653 = vunpack.c.l.b16 %v576
    %v654 = vunpack.c.l.b16 %v577
    %v655 = vunpack.c.h.b16 %v577
    %v656 = vunpack.c.l.b16 %v578
    %v657 = vunpack.c.l.b16 %v579
    %v658 = vunpack.c.h.b16 %v579
    %v659 = vunpack.c.l.b16 %v580
    %v660 = vunpack.c.l.b16 %v581
    %v661 = vunpack.c.h.b16 %v581
    %v662 = vunpack.c.l.b16 %v582
    %v663 = vpack.c.b16 %v618, %v615
    %v664 = vpack.c.b16 %v619, %v616
    %v665 = vpack.c.b16 %v620, %v617
    %v666 = vpack.c.b16 %v624, %v621
    %v667 = vpack.c.b16 %v625, %v622
    %v668 = vpack.c.b16 %v626, %v623
    %v669 = vpack.c.b16 %v630, %v627
    %v670 = vpack.c.b16 %v631, %v628
    %v671 = vpack.c.b16 %v632, %v629
    %v672 = vpack.c.b16 %v636, %v633
    %v673 = vpack.c.b16 %v637, %v634
    %v674 = vpack.c.b16 %v638, %v635
    %v675 = vpack.c.b16 %v642, %v639
    %v676 = vpack.c.b16 %v643, %v640
    %v677 = vpack.c.b16 %v644, %v641
    %v678 = vpack.c.b16 %v648, %v645
    %v679 = vpack.c.b16 %v649, %v646
    %v680 = vpack.c.b16 %v650, %v647
    %v681 = vpack.c.b16 %v654, %v651
    %v682 = vpack.c.b16 %v655, %v652
    %v683 = vpack.c.b16 %v656, %v653
    %v684 = vpack.c.b16 %v660, %v657
    %v685 = vpack.c.b16 %v661, %v658
    %v686 = vpack.c.b16 %v662, %v659
    %711 = vmatprep.subr.bf16.mxu0 %v685
    %712 = vmatpush1.bf16.msra.mxu0 %v684
    %713 = vmatprep.subr.bf16.mxu0 %v682
    %714 = vmatpush1.bf16.msra.mxu0 %v681
    %715 = vmatprep.subr.bf16.mxu0 %v679
    %716 = vmatpush1.bf16.msra.mxu0 %v678
    %717 = vmatprep.subr.bf16.mxu0 %v676
    %718 = vmatpush1.bf16.msra.mxu0 %v675
    %719 = vmatprep.subr.bf16.mxu0 %v673
    %720 = vmatpush1.bf16.msra.mxu0 %v672
    %721 = vmatprep.subr.bf16.mxu0 %v670
    %722 = vmatpush1.bf16.msra.mxu0 %v669
    %723 = vmatprep.subr.bf16.mxu0 %v667
    %724 = vmatpush1.bf16.msra.mxu0 %v666
    %725 = vmatprep.subr.bf16.mxu0 %v664
    %726 = vmatpush1.bf16.msra.mxu0 %v663
    %727 = vmatprep.subr.bf16.mxu0 0
    %728 = vmatpush2.bf16.msra.mxu0 0
    %729 = vmatprep.subr.bf16.mxu0 0
    %730 = vmatpush2.bf16.msra.mxu0 0
    %731 = vmatprep.subr.bf16.mxu0 0
    %732 = vmatpush2.bf16.msra.mxu0 0
    %733 = vmatprep.subr.bf16.mxu0 0
    %734 = vmatpush2.bf16.msra.mxu0 0
    %735 = vmatprep.subr.bf16.mxu0 0
    %736 = vmatpush2.bf16.msra.mxu0 0
    %737 = vmatprep.subr.bf16.mxu0 0
    %738 = vmatpush2.bf16.msra.mxu0 0
    %739 = vmatprep.subr.bf16.mxu0 0
    %740 = vmatpush2.bf16.msra.mxu0 0
    %741 = vmatprep.subr.bf16.mxu0 0
    %742 = vmatpush2.bf16.msra.mxu0 0
    %743 = vmatprep.mubr.bf16.mxu0 0
    %744 = vmatmul.mubr.bf16.gmra.mxu0 %v550
    %v745 = vpop.f32.mrf.mxu0
    %v746 = vadd.f32 0.0, %v745
    %v747 = vpop.f32.mrf.mxu0
    %v748 = vadd.f32 0.0, %v747
    %v749 = vpop.f32.mrf.mxu0
    %v750 = vadd.f32 0.0, %v749
    %v751 = vpop.f32.mrf.mxu0
    %v752 = vadd.f32 0.0, %v751
    %753 = vdwg.mxu0
    %754 = vmatprep.subr.bf16.mxu0 0
    %755 = vmatpush1.bf16.msra.mxu0 %v686
    %756 = vmatprep.subr.bf16.mxu0 0
    %757 = vmatpush1.bf16.msra.mxu0 %v683
    %758 = vmatprep.subr.bf16.mxu0 0
    %759 = vmatpush1.bf16.msra.mxu0 %v680
    %760 = vmatprep.subr.bf16.mxu0 0
    %761 = vmatpush1.bf16.msra.mxu0 %v677
    %762 = vmatprep.subr.bf16.mxu0 0
    %763 = vmatpush1.bf16.msra.mxu0 %v674
    %764 = vmatprep.subr.bf16.mxu0 0
    %765 = vmatpush1.bf16.msra.mxu0 %v671
    %766 = vmatprep.subr.bf16.mxu0 0
    %767 = vmatpush1.bf16.msra.mxu0 %v668
    %768 = vmatprep.subr.bf16.mxu0 0
    %769 = vmatpush1.bf16.msra.mxu0 %v665
    %770 = vmatprep.subr.bf16.mxu0 0
    %771 = vmatpush2.bf16.msra.mxu0 0
    %772 = vmatprep.subr.bf16.mxu0 0
    %773 = vmatpush2.bf16.msra.mxu0 0
    %774 = vmatprep.subr.bf16.mxu0 0
    %775 = vmatpush2.bf16.msra.mxu0 0
    %776 = vmatprep.subr.bf16.mxu0 0
    %777 = vmatpush2.bf16.msra.mxu0 0
    %778 = vmatprep.subr.bf16.mxu0 0
    %779 = vmatpush2.bf16.msra.mxu0 0
    %780 = vmatprep.subr.bf16.mxu0 0
    %781 = vmatpush2.bf16.msra.mxu0 0
    %782 = vmatprep.subr.bf16.mxu0 0
    %783 = vmatpush2.bf16.msra.mxu0 0
    %784 = vmatprep.subr.bf16.mxu0 0
    %785 = vmatpush2.bf16.msra.mxu0 0
    %786 = vmatprep.mubr.bf16.mxu0 0
    %787 = vmatmul.mubr.bf16.gmra.mxu0 %v550
    %v788 = vpop.f32.mrf.mxu0
    %v789 = vadd.f32 0.0, %v788
    %v790 = vpop.f32.mrf.mxu0
    %v791 = vpop.f32.mrf.mxu0
    %v792 = vadd.f32 0.0, %v791
    %v793 = vpop.f32.mrf.mxu0
    %794 = vdwg.mxu0
    %v795 = vpack.c.bf16 %v746, %v746
    %v796 = vpack.c.bf16 %v750, %v750
    %v797 = vpack.c.bf16 %v748, %v748
    %v798 = vpack.c.bf16 %v752, %v752
    %799 = vmatprep.subr.bf16.mxu0 0
    %800 = vmatpush1.bf16.xpose.msra.mxu0 0
    %801 = vmatprep.subr.bf16.mxu0 0
    %802 = vmatpush1.bf16.xpose.msra.mxu0 0
    %803 = vmatprep.subr.bf16.mxu0 0
    %804 = vmatpush1.bf16.xpose.msra.mxu0 0
    %805 = vmatprep.subr.bf16.mxu0 0
    %806 = vmatpush1.bf16.xpose.msra.mxu0 0
    %807 = vmatprep.subr.bf16.mxu0 0
    %808 = vmatpush1.bf16.xpose.msra.mxu0 0
    %809 = vmatprep.subr.bf16.mxu0 0
    %810 = vmatpush1.bf16.xpose.msra.mxu0 0
    %811 = vmatprep.subr.bf16.mxu0 0
    %812 = vmatpush1.bf16.xpose.msra.mxu0 0
    %813 = vmatprep.subr.bf16.mxu0 0
    %814 = vmatpush1.bf16.xpose.msra.mxu0 %v797
    %815 = vmatprep.subr.bf16.mxu0 0
    %816 = vmatpush2.bf16.xpose.msra.mxu0 0
    %817 = vmatprep.subr.bf16.mxu0 0
    %818 = vmatpush2.bf16.xpose.msra.mxu0 0
    %819 = vmatprep.subr.bf16.mxu0 0
    %820 = vmatpush2.bf16.xpose.msra.mxu0 0
    %821 = vmatprep.subr.bf16.mxu0 0
    %822 = vmatpush2.bf16.xpose.msra.mxu0 0
    %823 = vmatprep.subr.bf16.mxu0 0
    %824 = vmatpush2.bf16.xpose.msra.mxu0 0
    %825 = vmatprep.subr.bf16.mxu0 0
    %826 = vmatpush2.bf16.xpose.msra.mxu0 0
    %827 = vmatprep.subr.bf16.mxu0 0
    %828 = vmatpush2.bf16.xpose.msra.mxu0 0
    %829 = vmatprep.subr.bf16.mxu0 0
    %830 = vmatpush2.bf16.xpose.msra.mxu0 0
    %831 = vmatprep.mubr.bf16.mxu0 0
    %832 = vmatmul.mubr.bf16.gmra.mxu0 %v795
    %v833 = vpop.f32.mrf.mxu0
    %v834 = vadd.f32 0.0, %v833
    %v835 = vpop.f32.mrf.mxu0
    %v836 = vpop.f32.mrf.mxu0
    %v837 = vpop.f32.mrf.mxu0
    %838 = vdwg.mxu0
    %839 = vmatprep.subr.bf16.mxu0 0
    %840 = vmatpush1.bf16.xpose.msra.mxu0 0
    %841 = vmatprep.subr.bf16.mxu0 0
    %842 = vmatpush1.bf16.xpose.msra.mxu0 0
    %843 = vmatprep.subr.bf16.mxu0 0
    %844 = vmatpush1.bf16.xpose.msra.mxu0 0
    %845 = vmatprep.subr.bf16.mxu0 0
    %846 = vmatpush1.bf16.xpose.msra.mxu0 0
    %847 = vmatprep.subr.bf16.mxu0 0
    %848 = vmatpush1.bf16.xpose.msra.mxu0 0
    %849 = vmatprep.subr.bf16.mxu0 0
    %850 = vmatpush1.bf16.xpose.msra.mxu0 0
    %851 = vmatprep.subr.bf16.mxu0 0
    %852 = vmatpush1.bf16.xpose.msra.mxu0 0
    %853 = vmatprep.subr.bf16.mxu0 0
    %854 = vmatpush1.bf16.xpose.msra.mxu0 %v798
    %855 = vmatprep.subr.bf16.mxu0 0
    %856 = vmatpush2.bf16.xpose.msra.mxu0 0
    %857 = vmatprep.subr.bf16.mxu0 0
    %858 = vmatpush2.bf16.xpose.msra.mxu0 0
    %859 = vmatprep.subr.bf16.mxu0 0
    %860 = vmatpush2.bf16.xpose.msra.mxu0 0
    %861 = vmatprep.subr.bf16.mxu0 0
    %862 = vmatpush2.bf16.xpose.msra.mxu0 0
    %863 = vmatprep.subr.bf16.mxu0 0
    %864 = vmatpush2.bf16.xpose.msra.mxu0 0
    %865 = vmatprep.subr.bf16.mxu0 0
    %866 = vmatpush2.bf16.xpose.msra.mxu0 0
    %867 = vmatprep.subr.bf16.mxu0 0
    %868 = vmatpush2.bf16.xpose.msra.mxu0 0
    %869 = vmatprep.subr.bf16.mxu0 0
    %870 = vmatpush2.bf16.xpose.msra.mxu0 0
    %871 = vmatprep.mubr.bf16.mxu0 0
    %872 = vmatmul.mubr.bf16.gmra.mxu0 %v796
    %v873 = vpop.f32.mrf.mxu0
    %v874 = vadd.f32 0.0, %v873
    %v875 = vpop.f32.mrf.mxu0
    %v876 = vpop.f32.mrf.mxu0
    %v877 = vpop.f32.mrf.mxu0
    %878 = vdwg.mxu0
    %vm879 = vcmask 64512
    %v880 = vsel %vm879, %v834, -inf
    %881 = vmax.xlane.f32.xlu0 %v880
    %v882 = vpop.xlane.xlu0 %881
    %v883 = vsel %vm879, %v874, -inf
    %884 = vmax.xlane.f32.xlu0 %v883
    %v885 = vpop.xlane.xlu0 %884
    %v886 = vsub.f32 %v834, %v882
    %v887 = vsub.f32 %v874, %v885
    %v888 = vmul.f32 %v886, 1.442695
    %v889 = vpow.pop %v888
    %v890 = vmul.f32 %v887, 1.442695
    %v891 = vpow.pop %v890
    %v892 = vsel %vm879, %v889, 0.0
    %893 = vadd.xlane.f32.xlu0 %v892
    %v894 = vpop.xlane.xlu0 %893
    %v895 = vsel %vm879, %v891, 0.0
    %896 = vadd.xlane.f32.xlu0 %v895
    %v897 = vpop.xlane.xlu0 %896
    %v898 = vrcp.pop %v894
    %v899 = vrcp.pop %v897
    %v900 = vmul.f32 %v889, %v898
    %v901 = vmul.f32 %v891, %v899
    %v902 = vpack.c.bf16 %v900, %v900
    %v903 = vpack.c.bf16 %v901, %v901
    %v904 = vpack.c.bf16 %v789, %v789
    %v905 = vpack.c.bf16 %v792, %v792
    %v907 = vsel %vm879, %v902, 0
    %vm909 = vcmask 1043456
    %v911 = vsel %vm909, %v904, 0
    %913 = vmatprep.subr.bf16.mxu0 0
    %914 = vmatpush1.bf16.msra.mxu0 0
    %915 = vmatprep.subr.bf16.mxu0 0
    %916 = vmatpush1.bf16.msra.mxu0 0
    %917 = vmatprep.subr.bf16.mxu0 0
    %918 = vmatpush1.bf16.msra.mxu0 0
    %919 = vmatprep.subr.bf16.mxu0 0
    %920 = vmatpush1.bf16.msra.mxu0 0
    %921 = vmatprep.subr.bf16.mxu0 0
    %922 = vmatpush1.bf16.msra.mxu0 0
    %923 = vmatprep.subr.bf16.mxu0 0
    %924 = vmatpush1.bf16.msra.mxu0 0
    %925 = vmatprep.subr.bf16.mxu0 0
    %926 = vmatpush1.bf16.msra.mxu0 0
    %927 = vmatprep.subr.bf16.mxu0 0
    %928 = vmatpush1.bf16.msra.mxu0 %v911
    %929 = vmatprep.subr.bf16.mxu0 0
    %930 = vmatpush2.bf16.msra.mxu0 0
    %931 = vmatprep.subr.bf16.mxu0 0
    %932 = vmatpush2.bf16.msra.mxu0 0
    %933 = vmatprep.subr.bf16.mxu0 0
    %934 = vmatpush2.bf16.msra.mxu0 0
    %935 = vmatprep.subr.bf16.mxu0 0
    %936 = vmatpush2.bf16.msra.mxu0 0
    %937 = vmatprep.subr.bf16.mxu0 0
    %938 = vmatpush2.bf16.msra.mxu0 0
    %939 = vmatprep.subr.bf16.mxu0 0
    %940 = vmatpush2.bf16.msra.mxu0 0
    %941 = vmatprep.subr.bf16.mxu0 0
    %942 = vmatpush2.bf16.msra.mxu0 0
    %943 = vmatprep.subr.bf16.mxu0 0
    %944 = vmatpush2.bf16.msra.mxu0 0
    %945 = vmatprep.mubr.bf16.mxu0 0
    %946 = vmatmul.mubr.bf16.gmra.mxu0 %v907
    %v947 = vpop.f32.mrf.mxu0
    %v948 = vadd.f32 0.0, %v947
    %v949 = vpop.f32.mrf.mxu0
    %v950 = vpop.f32.mrf.mxu0
    %v951 = vpop.f32.mrf.mxu0
    %952 = vdwg.mxu0
    %v954 = vsel %vm879, %v903, 0
    %v957 = vsel %vm909, %v905, 0
    %959 = vmatprep.subr.bf16.mxu0 0
    %960 = vmatpush1.bf16.msra.mxu0 0
    %961 = vmatprep.subr.bf16.mxu0 0
    %962 = vmatpush1.bf16.msra.mxu0 0
    %963 = vmatprep.subr.bf16.mxu0 0
    %964 = vmatpush1.bf16.msra.mxu0 0
    %965 = vmatprep.subr.bf16.mxu0 0
    %966 = vmatpush1.bf16.msra.mxu0 0
    %967 = vmatprep.subr.bf16.mxu0 0
    %968 = vmatpush1.bf16.msra.mxu0 0
    %969 = vmatprep.subr.bf16.mxu0 0
    %970 = vmatpush1.bf16.msra.mxu0 0
    %971 = vmatprep.subr.bf16.mxu0 0
    %972 = vmatpush1.bf16.msra.mxu0 0
    %973 = vmatprep.subr.bf16.mxu0 0
    %974 = vmatpush1.bf16.msra.mxu0 %v957
    %975 = vmatprep.subr.bf16.mxu0 0
    %976 = vmatpush2.bf16.msra.mxu0 0
    %977 = vmatprep.subr.bf16.mxu0 0
    %978 = vmatpush2.bf16.msra.mxu0 0
    %979 = vmatprep.subr.bf16.mxu0 0
    %980 = vmatpush2.bf16.msra.mxu0 0
    %981 = vmatprep.subr.bf16.mxu0 0
    %982 = vmatpush2.bf16.msra.mxu0 0
    %983 = vmatprep.subr.bf16.mxu0 0
    %984 = vmatpush2.bf16.msra.mxu0 0
    %985 = vmatprep.subr.bf16.mxu0 0
    %986 = vmatpush2.bf16.msra.mxu0 0
    %987 = vmatprep.subr.bf16.mxu0 0
    %988 = vmatpush2.bf16.msra.mxu0 0
    %989 = vmatprep.subr.bf16.mxu0 0
    %990 = vmatpush2.bf16.msra.mxu0 0
    %991 = vmatprep.mubr.bf16.mxu0 0
    %992 = vmatmul.mubr.bf16.gmra.mxu0 %v954
    %v993 = vpop.f32.mrf.mxu0
    %v994 = vadd.f32 0.0, %v993
    %v995 = vpop.f32.mrf.mxu0
    %v996 = vpop.f32.mrf.mxu0
    %v997 = vpop.f32.mrf.mxu0
    %998 = vdwg.mxu0
    %v999 = vadd.f32 %v548, %v948
    %v1000 = vadd.f32 %v549, %v994
    %v1001 = vpack.c.bf16 %v1000, %v999
    %s1002 = scalar_lea.vmem [#allocation5], 128
    %v1003 = vld [vmem:[%s1002] sm:$0xf]
    %v1004 = vld [vmem:[%s1002 + $0x4] sm:$0xf]
    %v1005 = vld [vmem:[%s1002 + $0x8] sm:$0xf]
    %v1006 = vld [vmem:[%s1002 + $0xc] sm:$0xf]
    %v1007 = vld [vmem:[%s1002 + $0x10] sm:$0xf]
    %v1008 = vld [vmem:[%s1002 + $0x14] sm:$0xf]
    %v1009 = vld [vmem:[%s1002 + $0x18] sm:$0xf]
    %v1010 = vld [vmem:[%s1002 + $0x1c] sm:$0xf]
    %v1011 = vld [vmem:[%s1002 + $0x20] sm:$0xf]
    %v1012 = vld [vmem:[%s1002 + $0x24] sm:$0xf]
    %v1013 = vld [vmem:[%s1002 + $0x28] sm:$0xf]
    %v1014 = vld [vmem:[%s1002 + $0x2c] sm:$0xf]
    %v1015 = vld [vmem:[%s1002 + $0x30] sm:$0xf]
    %v1016 = vld [vmem:[%s1002 + $0x34] sm:$0xf]
    %v1017 = vld [vmem:[%s1002 + $0x38] sm:$0xf]
    %v1018 = vld [vmem:[%s1002 + $0x3c] sm:$0xf]
    %s1019 = scalar_lea.vmem %s2, 2
    %v1020 = vld [vmem:[%s1019] sm:$0x1]
    %v1022 = vlaneseq
    %v1023 = vshrl.u32 %v1022, 7
    %v1024 = vsub.s32 0, %v1023
    %v1025 = vrot.slane %v1020, %v1024
    %v1043 = vunpack.c.l.b16 %v1003
    %v1044 = vunpack.c.l.b16 %v1004
    %v1045 = vunpack.c.l.b16 %v1005
    %v1046 = vunpack.c.l.b16 %v1006
    %v1047 = vunpack.c.l.b16 %v1007
    %v1048 = vunpack.c.l.b16 %v1008
    %v1049 = vunpack.c.l.b16 %v1009
    %v1050 = vunpack.c.l.b16 %v1010
    %v1051 = vunpack.c.l.b16 %v1011
    %v1052 = vunpack.c.l.b16 %v1012
    %v1053 = vunpack.c.l.b16 %v1013
    %v1054 = vunpack.c.l.b16 %v1014
    %v1055 = vunpack.c.l.b16 %v1015
    %v1056 = vunpack.c.l.b16 %v1016
    %v1057 = vunpack.c.l.b16 %v1017
    %v1058 = vunpack.c.l.b16 %v1018
    %v1059 = vpack.c.b16 %v1044, %v1043
    %v1060 = vpack.c.b16 %v1046, %v1045
    %v1061 = vpack.c.b16 %v1048, %v1047
    %v1062 = vpack.c.b16 %v1050, %v1049
    %v1063 = vpack.c.b16 %v1052, %v1051
    %v1064 = vpack.c.b16 %v1054, %v1053
    %v1065 = vpack.c.b16 %v1056, %v1055
    %v1066 = vpack.c.b16 %v1058, %v1057
    %1075 = vmatprep.subr.bf16.mxu0 0
    %1076 = vmatpush1.bf16.msra.mxu0 %v1066
    %1077 = vmatprep.subr.bf16.mxu0 0
    %1078 = vmatpush1.bf16.msra.mxu0 %v1065
    %1079 = vmatprep.subr.bf16.mxu0 0
    %1080 = vmatpush1.bf16.msra.mxu0 %v1064
    %1081 = vmatprep.subr.bf16.mxu0 0
    %1082 = vmatpush1.bf16.msra.mxu0 %v1063
    %1083 = vmatprep.subr.bf16.mxu0 0
    %1084 = vmatpush1.bf16.msra.mxu0 %v1062
    %1085 = vmatprep.subr.bf16.mxu0 0
    %1086 = vmatpush1.bf16.msra.mxu0 %v1061
    %1087 = vmatprep.subr.bf16.mxu0 0
    %1088 = vmatpush1.bf16.msra.mxu0 %v1060
    %1089 = vmatprep.subr.bf16.mxu0 0
    %1090 = vmatpush1.bf16.msra.mxu0 %v1059
    %1091 = vmatprep.subr.bf16.mxu0 0
    %1092 = vmatpush2.bf16.msra.mxu0 0
    %1093 = vmatprep.subr.bf16.mxu0 0
    %1094 = vmatpush2.bf16.msra.mxu0 0
    %1095 = vmatprep.subr.bf16.mxu0 0
    %1096 = vmatpush2.bf16.msra.mxu0 0
    %1097 = vmatprep.subr.bf16.mxu0 0
    %1098 = vmatpush2.bf16.msra.mxu0 0
    %1099 = vmatprep.subr.bf16.mxu0 0
    %1100 = vmatpush2.bf16.msra.mxu0 0
    %1101 = vmatprep.subr.bf16.mxu0 0
    %1102 = vmatpush2.bf16.msra.mxu0 0
    %1103 = vmatprep.subr.bf16.mxu0 0
    %1104 = vmatpush2.bf16.msra.mxu0 0
    %1105 = vmatprep.subr.bf16.mxu0 0
    %1106 = vmatpush2.bf16.msra.mxu0 0
    %1107 = vmatprep.mubr.bf16.mxu0 0
    %1108 = vmatmul.mubr.bf16.gmra.mxu0 %v1001
    %v1109 = vpop.f32.mrf.mxu0
    %v1110 = vadd.f32 %v1025, %v1109
    %v1111 = vpop.f32.mrf.mxu0
    %v1112 = vpop.f32.mrf.mxu0
    %v1113 = vadd.f32 %v1025, %v1112
    %v1114 = vpop.f32.mrf.mxu0
    %1115 = vdwg.mxu0
    %v1116 = vmax.f32 %v1110, 0.0
    %v1117 = vmax.f32 %v1113, 0.0
    %v1118 = vpack.c.bf16 %v1117, %v1116
    %s1119 = scalar_lea.vmem [#allocation7], 128
    %v1120 = vld [vmem:[%s1119] sm:$0xf]
    %v1121 = vld [vmem:[%s1119 + $0x4] sm:$0xf]
    %v1122 = vld [vmem:[%s1119 + $0x8] sm:$0xf]
    %v1123 = vld [vmem:[%s1119 + $0xc] sm:$0xf]
    %v1124 = vld [vmem:[%s1119 + $0x10] sm:$0xf]
    %v1125 = vld [vmem:[%s1119 + $0x14] sm:$0xf]
    %v1126 = vld [vmem:[%s1119 + $0x18] sm:$0xf]
    %v1127 = vld [vmem:[%s1119 + $0x1c] sm:$0xf]
    %v1128 = vld [vmem:[%s1119 + $0x20] sm:$0xf]
    %v1129 = vld [vmem:[%s1119 + $0x24] sm:$0xf]
    %v1130 = vld [vmem:[%s1119 + $0x28] sm:$0xf]
    %v1131 = vld [vmem:[%s1119 + $0x2c] sm:$0xf]
    %v1132 = vld [vmem:[%s1119 + $0x30] sm:$0xf]
    %v1133 = vld [vmem:[%s1119 + $0x34] sm:$0xf]
    %v1134 = vld [vmem:[%s1119 + $0x38] sm:$0xf]
    %v1135 = vld [vmem:[%s1119 + $0x3c] sm:$0xf]
    %v1152 = vunpack.c.l.b16 %v1120
    %v1153 = vunpack.c.l.b16 %v1121
    %v1154 = vunpack.c.l.b16 %v1122
    %v1155 = vunpack.c.l.b16 %v1123
    %v1156 = vunpack.c.l.b16 %v1124
    %v1157 = vunpack.c.l.b16 %v1125
    %v1158 = vunpack.c.l.b16 %v1126
    %v1159 = vunpack.c.l.b16 %v1127
    %v1160 = vunpack.c.l.b16 %v1128
    %v1161 = vunpack.c.l.b16 %v1129
    %v1162 = vunpack.c.l.b16 %v1130
    %v1163 = vunpack.c.l.b16 %v1131
    %v1164 = vunpack.c.l.b16 %v1132
    %v1165 = vunpack.c.l.b16 %v1133
    %v1166 = vunpack.c.l.b16 %v1134
    %v1167 = vunpack.c.l.b16 %v1135
    %v1168 = vpack.c.b16 %v1153, %v1152
    %v1169 = vpack.c.b16 %v1155, %v1154
    %v1170 = vpack.c.b16 %v1157, %v1156
    %v1171 = vpack.c.b16 %v1159, %v1158
    %v1172 = vpack.c.b16 %v1161, %v1160
    %v1173 = vpack.c.b16 %v1163, %v1162
    %v1174 = vpack.c.b16 %v1165, %v1164
    %v1175 = vpack.c.b16 %v1167, %v1166
    %1184 = vmatprep.subr.bf16.mxu0 0
    %1185 = vmatpush1.bf16.msra.mxu0 %v1175
    %1186 = vmatprep.subr.bf16.mxu0 0
    %1187 = vmatpush1.bf16.msra.mxu0 %v1174
    %1188 = vmatprep.subr.bf16.mxu0 0
    %1189 = vmatpush1.bf16.msra.mxu0 %v1173
    %1190 = vmatprep.subr.bf16.mxu0 0
    %1191 = vmatpush1.bf16.msra.mxu0 %v1172
    %1192 = vmatprep.subr.bf16.mxu0 0
    %1193 = vmatpush1.bf16.msra.mxu0 %v1171
    %1194 = vmatprep.subr.bf16.mxu0 0
    %1195 = vmatpush1.bf16.msra.mxu0 %v1170
    %1196 = vmatprep.subr.bf16.mxu0 0
    %1197 = vmatpush1.bf16.msra.mxu0 %v1169
    %1198 = vmatprep.subr.bf16.mxu0 0
    %1199 = vmatpush1.bf16.msra.mxu0 %v1168
    %1200 = vmatprep.subr.bf16.mxu0 0
    %1201 = vmatpush2.bf16.msra.mxu0 0
    %1202 = vmatprep.subr.bf16.mxu0 0
    %1203 = vmatpush2.bf16.msra.mxu0 0
    %1204 = vmatprep.subr.bf16.mxu0 0
    %1205 = vmatpush2.bf16.msra.mxu0 0
    %1206 = vmatprep.subr.bf16.mxu0 0
    %1207 = vmatpush2.bf16.msra.mxu0 0
    %1208 = vmatprep.subr.bf16.mxu0 0
    %1209 = vmatpush2.bf16.msra.mxu0 0
    %1210 = vmatprep.subr.bf16.mxu0 0
    %1211 = vmatpush2.bf16.msra.mxu0 0
    %1212 = vmatprep.subr.bf16.mxu0 0
    %1213 = vmatpush2.bf16.msra.mxu0 0
    %1214 = vmatprep.subr.bf16.mxu0 0
    %1215 = vmatpush2.bf16.msra.mxu0 0
    %1216 = vmatprep.mubr.bf16.mxu0 0
    %1217 = vmatmul.mubr.bf16.gmra.mxu0 %v1118
    %v1218 = vpop.f32.mrf.mxu0
    %v1219 = vadd.f32 0.0, %v1218
    %v1220 = vpop.f32.mrf.mxu0
    %v1221 = vpop.f32.mrf.mxu0
    %v1222 = vadd.f32 0.0, %v1221
    %v1223 = vpop.f32.mrf.mxu0
    %1224 = vdwg.mxu0
    %v1225 = vadd.f32 %v999, %v1219
    %v1226 = vadd.f32 %v1000, %v1222
    %s1227 = scalar_lea.vmem %s4, 2
    %v1228 = vld [vmem:[%s1227] sm:$0x1]
    %v1230 = vlaneseq
    %v1231 = vshrl.u32 %v1230, 7
    %v1232 = vsub.s32 0, %v1231
    %v1233 = vrot.slane %v1228, %v1232
    %v1235 = vadd.f32 %v1225, %v1233
    %v1236 = vadd.f32 %v1226, %v1233
    %1237 = vst [vmem:[#allocation10] sm:$0xff] %v1235
    %1238 = vst [vmem:[#allocation10 + $0x8] sm:$0xff] %v1236
    // Predicated region
    $region42: #{tpu_custom_call.1} parent=1 // pred_check
      _
    $region43: #{tpu_custom_call.1} parent=1 // pred_check_branch
      %1240 = sbr.rel (0) target = $region45
    $region44: #{tpu_custom_call.1} parent=1 // pred_region
      %s1242 = ssub.s32 256, 256
      %1243 = vsyncadd [#allocation4], %s1242
      %s1244 = sshll.u32 [#allocation10], 4
      %s1245 = int_to_ptr.vmem [resolvable:$true] %s1244
      %1250 = dma.vmem_to_hbm [thread:$0]  %s1245, 256, %s6, [#allocation4], 128, 128, 8
    $region45: #{tpu_custom_call.1} parent=1 // pred_fallthru
      _
    // Predicated region
    $region46: #{tpu_custom_call.1} parent=1 // pred_check
      _
    $region47: #{tpu_custom_call.1} parent=1 // pred_check_branch
      %1252 = sbr.rel (0) target = $region49
    $region48: #{tpu_custom_call.1} parent=1 // pred_region
      %1253 = dma.done [#allocation4], 256
    $region49: #{tpu_custom_call.1} parent=1 // pred_fallthru
      _
    %1254 = vsyncpa [#allocation3], 1
    %1255 = vsyncpa [#allocation6], 1
    %1256 = vsyncpa [#allocation9], 1
    %1257 = vsyncpa [#allocation4], 1

</llo_original>
